<compile_context>
chip_gen: v7x
topology: tpu7x:2x2x1
jax: 0.10.0
libtpu: 0.0.40
codegen_flags: <defaults>
</compile_context>

<pallas_src>
import math

import jax
import jax.numpy as jnp
from jax.experimental import pallas as pl
from jax.experimental.pallas import tpu as pltpu

_LANE = 128
_TILE_HBM_TARGET_BYTES = 4 * 1024 * 1024   # ~4 MiB of HBM traffic per grid step
_NUM_BUFFERS = 2                           # BlockSpec default double buffering
                                           # (pl.Buffered(3) is a possible later sweep)


def _round_up(x, m):
    return ((x + m - 1) // m) * m


def _sublane(dtype):
    """Dtype-aware sublane alignment: 8 (4-byte), 16 (2-byte), 32 (1-byte)."""
    return max(8, 8 * (4 // jnp.dtype(dtype).itemsize))


def _vmem_budget_bytes():
    """Generation-aware VMEM budget (v5e/v6e: 128 MiB cap -> 48 MiB; v7x: 64 -> 32)."""
    cap = 64 * 1024 * 1024
    try:
        cap = int(getattr(pltpu.get_tpu_info(), "vmem_capacity_bytes", cap))
    except Exception:
        pass
    return min(cap // 2, 48 * 1024 * 1024)


def _choose_tile_rows(total_rows, hbm_row_bytes, vmem_row_bytes, sub, vmem_budget):
    """Pick a row tile: big enough to amortize per-step overhead, small enough for VMEM,
    and (if possible) yielding >= 2 tiles so v7x's two TensorCores both get work."""
    if total_rows <= sub:
        return max(total_rows, 1)          # full-dim block is always a legal block shape
    tn_traffic = _TILE_HBM_TARGET_BYTES // max(hbm_row_bytes, 1)
    tn_vmem = int(vmem_budget * 0.6) // (_NUM_BUFFERS * max(vmem_row_bytes, 1))
    tn = max(sub, min(tn_traffic, tn_vmem))
    tn = min(tn, _round_up(pl.cdiv(total_rows, 2), sub))    # keep >= 2 tiles
    return max(sub, (tn // sub) * sub)


def _compiler_params(vmem_budget):
    return pltpu.CompilerParams(
        dimension_semantics=("parallel",),
        vmem_limit_bytes=int(vmem_budget),
    )


# -----------------------------------------------------------------------------
# Branch 1 (label_type == 2): multi-class cross entropy, mean reduction,
# target ids are 1-based (kernel shifts to 0-based).
# -----------------------------------------------------------------------------
def _ce_kernel(nrows_ref, logits_ref, target_ref, partial_ref):
    i = pl.program_id(0)
    x = logits_ref[...].astype(jnp.float32)                  # (TN, C)
    t = target_ref[...].astype(jnp.int32) - 1                # (TN, 1), 0-based ids

    # numerically stable per-row logsumexp
    m = jnp.max(x, axis=-1, keepdims=True)
    lse = m + jnp.log(jnp.sum(jnp.exp(x - m), axis=-1, keepdims=True))

    # gather the target logit via a select (no materialized one-hot).
    # NOTE: out-of-range ids silently contribute 0 (no error), as in v2.
    cols = jax.lax.broadcasted_iota(jnp.int32, x.shape, 1)
    tgt = jnp.sum(jnp.where(cols == t, x, 0.0), axis=-1, keepdims=True)

    per_row = lse - tgt                                       # (TN, 1)

    # mask rows of the (possibly partial) last block beyond the real batch size
    tn = x.shape[0]
    rows = i * tn + jax.lax.broadcasted_iota(jnp.int32, (tn, 1), 0)
    per_row = jnp.where(rows < nrows_ref[0], per_row, 0.0)

    # lane-dense (1, 8, 128) partial; wrapper reads [:, 0, 0]
    partial_ref[...] = jnp.full(partial_ref.shape, jnp.sum(per_row), dtype=jnp.float32)


def cross_entropy_loss(logits, target, *, tile_rows=None):
    """logits: (N, C) float; target: (N,) with 1-based class ids in [1, C]."""
    n, c = logits.shape
    target2d = target.reshape(n, 1).astype(jnp.int32)

    itemsize = jnp.dtype(logits.dtype).itemsize
    sub = max(_sublane(logits.dtype), _sublane(jnp.int32))
    vmem_budget = _vmem_budget_bytes()
    # HBM bytes/row: logits + 4 B target.  VMEM bytes/row: logits + the lane-padded
    # (tn, 1) int32 target block (128 lanes * 4 B = 512 B/row).
    tn = tile_rows if tile_rows is not None else _choose_tile_rows(
        n, c * itemsize + 4, c * itemsize + _LANE * 4, sub, vmem_budget)
    num_tiles = pl.cdiv(n, tn)

    partials = pl.pallas_call(
        _ce_kernel,
        out_shape=jax.ShapeDtypeStruct((num_tiles, 8, _LANE), jnp.float32),
        grid_spec=pltpu.PrefetchScalarGridSpec(
            num_scalar_prefetch=1,
            grid=(num_tiles,),
            in_specs=[
                pl.BlockSpec((tn, c), lambda i, nref: (i, 0)),
                pl.BlockSpec((tn, 1), lambda i, nref: (i, 0)),
            ],
            out_specs=pl.BlockSpec((1, 8, _LANE), lambda i, nref: (i, 0, 0)),
        ),
        compiler_params=_compiler_params(vmem_budget),
    )(jnp.asarray([n], dtype=jnp.int32), logits, target2d)

    return jnp.sum(partials[:, 0, 0]) / jnp.float32(n)


# -----------------------------------------------------------------------------
# Branch 2 (label_type != 2): elementwise BCE on sigmoid scores,
# loss = sum(loss_terms) / first-dim size.
# -----------------------------------------------------------------------------
def _bce_kernel(nrows_ref, x_ref, t_ref, partial_ref):
    i = pl.program_id(0)
    x = x_ref[...].astype(jnp.float32)                        # (TN, L)

    # -(ta*log(sigmoid(x)) + (1-ta)*log(1-sigmoid(x))) == softplus(x) - 1{t==1}*x
    # softplus(x) = max(x,0) + log(1+exp(-|x|)): stable, never -inf/NaN.
    softplus = jnp.maximum(x, 0.0) + jnp.log(1.0 + jnp.exp(-jnp.abs(x)))
    loss = softplus - jnp.where(t_ref[...].astype(jnp.float32) == 1.0, x, 0.0)

    # mask rows of the (possibly partial) last block beyond the real row count
    tn = x.shape[0]
    rows = i * tn + jax.lax.broadcasted_iota(jnp.int32, (tn, 1), 0)
    loss = jnp.where(rows < nrows_ref[0], loss, 0.0)

    partial_ref[...] = jnp.full(partial_ref.shape, jnp.sum(loss), dtype=jnp.float32)


def bce_loss(inputs, target, *, tile_rows=None):
    """inputs: (N, ...) logits; target: same shape (positive where == 1).
    Returns sum(elementwise BCE) / inputs.shape[0] (matches the PyTorch branch)."""
    n0 = inputs.shape[0]
    if inputs.ndim >= 2:
        last = inputs.shape[-1]
        rows = math.prod(inputs.shape[:-1])
    else:
        last, rows = 1, inputs.shape[0]
    x2 = inputs.reshape(rows, last)     # collapses leading dims only; no pad, no astype
    t2 = target.reshape(rows, last)

    sub = max(_sublane(x2.dtype), _sublane(t2.dtype))
    vmem_budget = _vmem_budget_bytes()
    x_item = jnp.dtype(x2.dtype).itemsize
    t_item = jnp.dtype(t2.dtype).itemsize
    row_hbm = last * (x_item + t_item)
    row_vmem = _round_up(last, _LANE) * (x_item + t_item)     # lane padding in VMEM
    tn = tile_rows if tile_rows is not None else _choose_tile_rows(
        rows, row_hbm, row_vmem, sub, vmem_budget)
    num_tiles = pl.cdiv(rows, tn)

    partials = pl.pallas_call(
        _bce_kernel,
        out_shape=jax.ShapeDtypeStruct((num_tiles, 8, _LANE), jnp.float32),
        grid_spec=pltpu.PrefetchScalarGridSpec(
            num_scalar_prefetch=1,
            grid=(num_tiles,),
            in_specs=[
                pl.BlockSpec((tn, last), lambda i, nref: (i, 0)),
                pl.BlockSpec((tn, last), lambda i, nref: (i, 0)),
            ],
            out_specs=pl.BlockSpec((1, 8, _LANE), lambda i, nref: (i, 0, 0)),
        ),
        compiler_params=_compiler_params(vmem_budget),
    )(jnp.asarray([rows], dtype=jnp.int32), x2, t2)

    return jnp.sum(partials[:, 0, 0]) / jnp.float32(n0)


# -----------------------------------------------------------------------------
# Module-equivalent wrapper
# -----------------------------------------------------------------------------
class CrossEntropy:
    def __init__(self, label_type):
        # TODO(synk): original __init__ reads ./dataset/train.csv (unused in forward).
        self.label_type = label_type

    def __call__(self, inputs, target):
        if self.label_type == 2:
            return cross_entropy_loss(inputs, target.reshape(-1))
        return bce_loss(inputs, target)


if __name__ == "__main__":
    key = jax.random.PRNGKey(0)
    k1, k2, k3, k4 = jax.random.split(key, 4)

    # --- label_type == 2: multi-class CE; N is not a multiple of the chosen tile ------
    N, C = 20, 32
    logits = jax.random.normal(k1, (N, C), dtype=jnp.float32)
    labels = jax.random.randint(k2, (N,), 1, C + 1, dtype=jnp.int32)   # 1-based ids

    ce_mod = CrossEntropy(label_type=2)
    ce_val = jax.block_until_ready(ce_mod(logits, labels))             # 2 tiles, ragged tail
    ce_val_tiled = jax.block_until_ready(
        cross_entropy_loss(logits, labels, tile_rows=8))               # 3 tiles, partial last

    t0 = labels - 1
    ref_ce = jnp.mean(
        jax.nn.logsumexp(logits, axis=-1)
        - jnp.take_along_axis(logits, t0[:, None], axis=-1)[:, 0])
    assert jnp.allclose(ce_val, ref_ce, rtol=1e-5, atol=1e-5), (ce_val, ref_ce)
    assert jnp.allclose(ce_val_tiled, ref_ce, rtol=1e-5, atol=1e-5), (ce_val_tiled, ref_ce)

    # --- label_type != 2: sigmoid BCE, sum / first-dim size ----------------------------
    Nb, Cb = 8, 32
    x = jax.random.normal(k3, (Nb, Cb), dtype=jnp.float32)
    tgt = jax.random.randint(k4, (Nb, Cb), 1, 3).astype(jnp.float32)   # values in {1, 2}

    bce_mod = CrossEntropy(label_type=0)
    bce_val = jax.block_until_ready(bce_mod(x, tgt))

    scores = jax.nn.sigmoid(x)
    ta = (tgt == 1.0).astype(jnp.float32)
    ref_bce = jnp.sum(-(ta * jnp.log(scores) + (1 - ta) * jnp.log(1 - scores))) / Nb
    assert jnp.allclose(bce_val, ref_bce, rtol=1e-5, atol=1e-5), (bce_val, ref_bce)

    # second BCE case: several row tiles with a ragged (masked) last block
    Nb2, Cb2 = 40, 64
    x2 = jax.random.normal(k3, (Nb2, Cb2), dtype=jnp.float32)
    tgt2 = jax.random.randint(k4, (Nb2, Cb2), 1, 3).astype(jnp.float32)
    bce_val2 = jax.block_until_ready(bce_loss(x2, tgt2, tile_rows=16))  # 3 tiles

    scores2 = jax.nn.sigmoid(x2)
    ta2 = (tgt2 == 1.0).astype(jnp.float32)
    ref_bce2 = jnp.sum(-(ta2 * jnp.log(scores2) + (1 - ta2) * jnp.log(1 - scores2))) / Nb2
    assert jnp.allclose(bce_val2, ref_bce2, rtol=1e-5, atol=1e-5), (bce_val2, ref_bce2)

    print("KERNEL_OK")
</pallas_src>

<mosaic_0001>
module attributes {stable_mosaic.version = 11 : i64} {
  func.func @_ce_kernel(%arg0: i32, %arg1: memref<1xi32, #tpu.memory_space<smem>>, %arg2: memref<16x32xf32, #tpu.memory_space<vmem>>, %arg3: memref<16x1xi32, #tpu.memory_space<vmem>>, %arg4: memref<1x8x128xf32, #tpu.memory_space<vmem>>) attributes {dimension_semantics = [#tpu.dimension_semantics<parallel>], iteration_bounds = array<i64: 2>, scalar_prefetch = 1 : i64, scratch_operands = 0 : i64, tpu.core_type = #tpu.core_type<tc>, window_params = [{transform_indices = @transform_0, window_bounds = array<i64: 16, 32>}, {transform_indices = @transform_1, window_bounds = array<i64: 16, 1>}, {transform_indices = @transform_2, window_bounds = array<i64: 1, 8, 128>}]} {
    %c0 = arith.constant 0 : index
    %c0_0 = arith.constant 0 : index
    %0 = vector.load %arg2[%c0, %c0_0] : memref<16x32xf32, #tpu.memory_space<vmem>>, vector<16x32xf32>
    %c0_1 = arith.constant 0 : index
    %c0_2 = arith.constant 0 : index
    %1 = vector.load %arg3[%c0_1, %c0_2] : memref<16x1xi32, #tpu.memory_space<vmem>>, vector<16x1xi32>
    %c1_i32 = arith.constant 1 : i32
    %2 = vector.broadcast %c1_i32 : i32 to vector<16x1xi32>
    %3 = arith.subi %1, %2 : vector<16x1xi32>
    %cst = arith.constant dense<0xFF800000> : vector<16xf32>
    %4 = vector.multi_reduction <maximumf>, %0, %cst [1] : vector<16x32xf32> to vector<16xf32>
    %5 = vector.shape_cast %4 : vector<16xf32> to vector<16x1xf32>
    %6 = vector.broadcast %5 : vector<16x1xf32> to vector<16x32xf32>
    %7 = arith.subf %0, %6 : vector<16x32xf32>
    %8 = math.exp %7 : vector<16x32xf32>
    %cst_3 = arith.constant dense<0.000000e+00> : vector<16xf32>
    %9 = vector.multi_reduction <add>, %8, %cst_3 [1] : vector<16x32xf32> to vector<16xf32>
    %10 = vector.shape_cast %9 : vector<16xf32> to vector<16x1xf32>
    %11 = math.log %10 : vector<16x1xf32>
    %12 = arith.addf %5, %11 : vector<16x1xf32>
    %13 = tpu.iota {dimensions = array<i32: 1>} : vector<16x32xi32>
    %14 = vector.broadcast %3 : vector<16x1xi32> to vector<16x32xi32>
    %15 = arith.cmpi eq, %13, %14 : vector<16x32xi32>
    %cst_4 = arith.constant 0.000000e+00 : f32
    %16 = vector.broadcast %cst_4 : f32 to vector<16x32xf32>
    %17 = arith.select %15, %0, %16 : vector<16x32xi1>, vector<16x32xf32>
    %cst_5 = arith.constant dense<0.000000e+00> : vector<16xf32>
    %18 = vector.multi_reduction <add>, %17, %cst_5 [1] : vector<16x32xf32> to vector<16xf32>
    %19 = vector.shape_cast %18 : vector<16xf32> to vector<16x1xf32>
    %20 = arith.subf %12, %19 : vector<16x1xf32>
    %c16_i32 = arith.constant 16 : i32
    %21 = arith.muli %arg0, %c16_i32 : i32
    %22 = tpu.iota {dimensions = array<i32: 0>} : vector<16x1xi32>
    %23 = vector.broadcast %21 : i32 to vector<16x1xi32>
    %24 = arith.addi %23, %22 : vector<16x1xi32>
    %c0_6 = arith.constant 0 : index
    %25 = memref.load %arg1[%c0_6] : memref<1xi32, #tpu.memory_space<smem>>
    %26 = vector.broadcast %25 : i32 to vector<16x1xi32>
    %27 = arith.cmpi slt, %24, %26 : vector<16x1xi32>
    %cst_7 = arith.constant 0.000000e+00 : f32
    %28 = vector.broadcast %cst_7 : f32 to vector<16x1xf32>
    %29 = arith.select %27, %20, %28 : vector<16x1xi1>, vector<16x1xf32>
    %30 = vector.shape_cast %29 : vector<16x1xf32> to vector<1x16x1xf32>
    %cst_8 = arith.constant dense<0.000000e+00> : vector<1xf32>
    %31 = vector.multi_reduction <add>, %30, %cst_8 [1, 2] : vector<1x16x1xf32> to vector<1xf32>
    %32 = vector.shape_cast %31 : vector<1xf32> to vector<1x1x1xf32>
    %33 = vector.extract %32[0, 0, 0] : f32 from vector<1x1x1xf32>
    %34 = vector.broadcast %33 : f32 to vector<1x8x128xf32>
    %c0_9 = arith.constant 0 : index
    %c0_10 = arith.constant 0 : index
    %c0_11 = arith.constant 0 : index
    %35 = vector.load %arg4[%c0_9, %c0_10, %c0_11] : memref<1x8x128xf32, #tpu.memory_space<vmem>>, vector<1x8x128xf32>
    tpu.vector_store %arg4[%c0_9, %c0_10, %c0_11], %34 {strides = array<i32>} : memref<1x8x128xf32, #tpu.memory_space<vmem>>, vector<1x8x128xf32>,
    return
  }
  func.func @transform_0(%arg0: i32, %arg1: memref<1xi32, #tpu.memory_space<smem>>) -> (i32, i32) {
    %c0_i32 = arith.constant 0 : i32
    %c0_i32_0 = arith.constant 0 : i32
    return %arg0, %c0_i32 : i32, i32
  }
  func.func @transform_1(%arg0: i32, %arg1: memref<1xi32, #tpu.memory_space<smem>>) -> (i32, i32) {
    %c0_i32 = arith.constant 0 : i32
    %c0_i32_0 = arith.constant 0 : i32
    return %arg0, %c0_i32 : i32, i32
  }
  func.func @transform_2(%arg0: i32, %arg1: memref<1xi32, #tpu.memory_space<smem>>) -> (i32, i32, i32) {
    %c0_i32 = arith.constant 0 : i32
    %c0_i32_0 = arith.constant 0 : i32
    %c0_i32_1 = arith.constant 0 : i32
    return %arg0, %c0_i32, %c0_i32_0 : i32, i32, i32
  }
}

</mosaic_0001>

<llo_original>
// kernel: tpu_custom_call.1
$region0: #{tpu_custom_call.1}
  #allocation0 [shape = 'u32[]', space=smem, size = 0x4, offset = 0x4, fixed_abs, tag = 'smem constant byte address 0x4 - core index']
  #allocation1 [shape = 'u32[144,128]{1,0:T(1,128)}', space=vmem, size = 0x12000, scoped, tag = 'internal scratch']
  #allocation2 [shape = 's32[1]{0}', space=sflag, size = 0x4, scoped, tag = 'scoped memory for tpu_custom_call.1']
  #allocation3 [shape = 's32[1]{0:T(128)S(6)}', space=smem, size = 0x200, scoped, tag = 'prefetched SMEM operand 0']
  %s0 = inlined_call_operand.<no memory space> [shape: s32[1], index: 0, kind: input, shape index: {}]
  %s1 = inlined_call_operand.vmem [shape: f32[20,32], index: 1, kind: input, shape index: {}]
  %s2 = inlined_call_operand.vmem [shape: s32[20,1], index: 2, kind: input, shape index: {}]
  %s3 = inlined_call_operand.hbm [shape: f32[2,8,128], index: 3, kind: output, shape index: {}]
  %s4 = sld [smem:[#allocation0]]
  $region41: #{tpu_custom_call.1} parent=0
    _
  %s6 = ssub.s32 1, %s4
  %s7 = scalar_select 0, %s6, %s4
  %8 = sst [smem:[#allocation3]] %s0
  $region1: #{tpu_custom_call.1} parent=0
    #allocation4 [shape = 'u8[8192]{0}', space=vmem, size = 0x2000, scoped, tag = 'output window, operand 0']
    #allocation5 [shape = 's32[2]{0}', space=sflag, size = 0x8, scoped, tag = 'scoped memory for tpu_custom_call.1']
    %9 = vsyncpa [#allocation5], 0
    %s10 = scalar_lea.sflag [#allocation5], 1
    %11 = vsyncpa %s10, 0
    loop: start=0, step=1, limit=4
    $region2: #{tpu_custom_call.1} parent=1 // loop_pre_header
      _
    $region3: #{tpu_custom_call.1} parent=1 // loop_header
      %s13 = sphi 0, %s17
      %p14 = scmp.ge.s32.totalorder %s13, 4
      %s23 = sphi 0, %s25
      %s26 = sphi 0, %s23
      %s27 = sphi 0, %s26
      %s43 = sphi 0, %s27
      %s49 = sphi 0, %s51
      %s52 = sphi 0, %s49
      %s53 = sphi 0, %s52
      %s69 = sphi 0, %s53
      %s75 = sphi 0, %s77
      %s78 = sphi 0, %s75
      %s79 = sphi 0, %s78
      %s95 = sphi 0, %s79
    $region4: #{tpu_custom_call.1} parent=1 // loop_header_branch
      %16 = sbr.rel (%p14) target = $region8
    $region5: #{tpu_custom_call.1} parent=1 // loop_body
      %s18 = ssub.s32 %s13, 1
      %s19 = ssub.s32 %s13, 2
      %s20 = sadd.s32 %s13, 1
      %s21 = ssub.s32 %s13, %s20
      %p22 = scmp.eq.s32.totalorder %s21, 0
      %s24 = sadd.s32 %s23, 1
      %s25 = scalar_select %p22, %s23, %s24
      %p28 = pneg %p22
      %p29 = scmp.eq.s32.totalorder %s13, 1
      %p30 = por %p28, %p29
      %p31 = scmp.ne.s32.totalorder %s23, %s26
      %p32 = scmp.eq.s32.totalorder %s13, 0
      %p33 = por %p31, %p32
      %p34 = scmp.ne.s32.totalorder %s23, %s26
      %p35 = scmp.eq.s32.totalorder %s18, 1
      %p36 = por %p34, %p35
      %p37 = scmp.ne.s32.totalorder %s26, %s27
      %p38 = scmp.eq.s32.totalorder %s18, 0
      %p39 = por %p37, %p38
      %p40 = scmp.ne.s32.totalorder %s26, %s27
      %p41 = scmp.eq.s32.totalorder %s19, 1
      %p42 = por %p40, %p41
      %p44 = scmp.ne.s32.totalorder %s27, %s43
      %p45 = scmp.eq.s32.totalorder %s19, 0
      %p46 = por %p44, %p45
      %s47 = ssub.s32 %s13, %s20
      %p48 = scmp.eq.s32.totalorder %s47, 0
      %s50 = sadd.s32 %s49, 1
      %s51 = scalar_select %p48, %s49, %s50
      %p54 = pneg %p48
      %p55 = scmp.eq.s32.totalorder %s13, 1
      %p56 = por %p54, %p55
      %p57 = scmp.ne.s32.totalorder %s49, %s52
      %p58 = scmp.eq.s32.totalorder %s13, 0
      %p59 = por %p57, %p58
      %p60 = scmp.ne.s32.totalorder %s49, %s52
      %p61 = scmp.eq.s32.totalorder %s18, 1
      %p62 = por %p60, %p61
      %p63 = scmp.ne.s32.totalorder %s52, %s53
      %p64 = scmp.eq.s32.totalorder %s18, 0
      %p65 = por %p63, %p64
      %p66 = scmp.ne.s32.totalorder %s52, %s53
      %p67 = scmp.eq.s32.totalorder %s19, 1
      %p68 = por %p66, %p67
      %p70 = scmp.ne.s32.totalorder %s53, %s69
      %p71 = scmp.eq.s32.totalorder %s19, 0
      %p72 = por %p70, %p71
      %s73 = ssub.s32 %s13, %s20
      %p74 = scmp.eq.s32.totalorder %s73, 0
      %s76 = sadd.s32 %s75, 1
      %s77 = scalar_select %p74, %s75, %s76
      %p80 = pneg %p74
      %p81 = scmp.eq.s32.totalorder %s13, 1
      %p82 = por %p80, %p81
      %p83 = scmp.ne.s32.totalorder %s75, %s78
      %p84 = scmp.eq.s32.totalorder %s13, 0
      %p85 = por %p83, %p84
      %p86 = scmp.ne.s32.totalorder %s75, %s78
      %p87 = scmp.eq.s32.totalorder %s18, 1
      %p88 = por %p86, %p87
      %p89 = scmp.ne.s32.totalorder %s78, %s79
      %p90 = scmp.eq.s32.totalorder %s18, 0
      %p91 = por %p89, %p90
      %p92 = scmp.ne.s32.totalorder %s78, %s79
      %p93 = scmp.eq.s32.totalorder %s19, 1
      %p94 = por %p92, %p93
      %p96 = scmp.ne.s32.totalorder %s79, %s95
      %p97 = scmp.eq.s32.totalorder %s19, 0
      %p98 = por %p96, %p97
      %p99 = scmp.le.s32.totalorder 1, %s13
      %p100 = scmp.lt.s32.totalorder %s13, 3
      %p101 = pnand %p99, %p100
      %p102 = pneg %p101
      // Predicated region
      $region9: #{tpu_custom_call.1} parent=5 // pred_check
        _
      $region10: #{tpu_custom_call.1} parent=5 // pred_check_branch
        %104 = sbr.rel (%p101) target = $region12
      $region11: #{tpu_custom_call.1} parent=5 // pred_region
        %s105 = ssub.s32 %s13, 1
      $region12: #{tpu_custom_call.1} parent=5 // pred_fallthru
        _
      %p106 = scmp.lt.s32.totalorder %s13, 2
      // Predicated region
      $region13: #{tpu_custom_call.1} parent=5 // pred_check
        %p107 = pneg %p106
      $region14: #{tpu_custom_call.1} parent=5 // pred_check_branch
        %109 = sbr.rel (%p107) target = $region16
      $region15: #{tpu_custom_call.1} parent=5 // pred_region
        // Predicated region
        $region17: #{tpu_custom_call.1} parent=15 // pred_check
          %p110 = pneg %p33
        $region18: #{tpu_custom_call.1} parent=15 // pred_check_branch
          %112 = sbr.rel (%p110) target = $region20
        $region19: #{tpu_custom_call.1} parent=15 // pred_region
          %s113 = smul.u32 2, %s13
          %s114 = ssub.s32 3, %s113
          %p115 = scmp.lt.s32.totalorder %s114, 2
          %s116 = scalar_select %p115, %s114, 2
          %s117 = smul.u32 128, %s116
          %p118 = scmp.lt.s32.totalorder %s113, 2
          %s119 = scalar_select %p118, %s113, 2
          %s120 = smul.addr %s119, 8
          %s121 = scalar_lea.vmem %s1, %s120
          %s122 = smul.u32 2, %s13
          %s123 = ssub.s32 3, %s122
          %p124 = scmp.lt.s32.totalorder %s123, 2
          %s125 = scalar_select %p124, %s123, 2
          %s126 = smul.u32 128, %s125
        $region20: #{tpu_custom_call.1} parent=15 // pred_fallthru
          _
        // Predicated region
        $region21: #{tpu_custom_call.1} parent=15 // pred_check
          %p127 = pneg %p59
        $region22: #{tpu_custom_call.1} parent=15 // pred_check_branch
          %129 = sbr.rel (%p127) target = $region24
        $region23: #{tpu_custom_call.1} parent=15 // pred_region
          %s130 = smul.u32 2, %s13
          %s131 = ssub.s32 3, %s130
          %p132 = scmp.lt.s32.totalorder %s131, 2
          %s133 = scalar_select %p132, %s131, 2
          %s134 = smul.u32 128, %s133
          %p135 = scmp.lt.s32.totalorder %s130, 2
          %s136 = scalar_select %p135, %s130, 2
          %s137 = smul.addr %s136, 8
          %s138 = scalar_lea.vmem %s2, %s137
          %s139 = smul.u32 2, %s13
          %s140 = ssub.s32 3, %s139
          %p141 = scmp.lt.s32.totalorder %s140, 2
          %s142 = scalar_select %p141, %s140, 2
          %s143 = smul.u32 128, %s142
        $region24: #{tpu_custom_call.1} parent=15 // pred_fallthru
          _
      $region16: #{tpu_custom_call.1} parent=5 // pred_fallthru
        _
      %p144 = scmp.le.s32.totalorder 1, %s13
      %p145 = scmp.lt.s32.totalorder %s13, 3
      %p146 = pnand %p144, %p145
      %p147 = pneg %p146
      // Predicated region
      $region25: #{tpu_custom_call.1} parent=5 // pred_check
        _
      $region26: #{tpu_custom_call.1} parent=5 // pred_check_branch
        %149 = sbr.rel (%p146) target = $region28
      $region27: #{tpu_custom_call.1} parent=5 // pred_region
        %s150 = ssub.s32 %s13, 1
        %s151 = smul.u32 2, %s18
        %s152 = ssub.s32 3, %s151
        %p153 = scmp.lt.s32.totalorder %s152, 2
        %s154 = scalar_select %p153, %s152, 2
        %s155 = smul.u32 128, %s154
        %p156 = scmp.lt.s32.totalorder %s151, 2
        %s157 = scalar_select %p156, %s151, 2
        %s158 = smul.addr %s157, 8
        %s159 = scalar_lea.vmem %s1, %s158
        %p160 = pneg %p39
        %p161 = pneg %p36
        %s162 = smul.u32 2, %s18
        %s163 = ssub.s32 3, %s162
        %p164 = scmp.lt.s32.totalorder %s163, 2
        %s165 = scalar_select %p164, %s163, 2
        %s166 = smul.u32 128, %s165
        %p167 = scmp.lt.s32.totalorder %s162, 2
        %s168 = scalar_select %p167, %s162, 2
        %s169 = smul.addr %s168, 8
        %s170 = scalar_lea.vmem %s2, %s169
        %p171 = pneg %p65
        %p172 = pneg %p62
        %p173 = pneg %p91
        %p174 = pneg %p88
        %s175 = sand.u32 %s78, 1
        %s176 = scalar_lea.sflag [#allocation5], %s175
        %s177 = sand.u32 %s78, 1
        %s178 = smul.addr %s177, 8
        %s179 = scalar_lea.vmem [#allocation4], %s178
        %s180 = smul.u32 2, %s18
        %s181 = ssub.s32 3, %s180
        %p182 = scmp.lt.s32.totalorder %s181, 2
        %s183 = scalar_select %p182, %s181, 2
        %s184 = smul.u32 128, %s183
        %p185 = scmp.lt.s32.totalorder %s180, 2
        %s186 = scalar_select %p185, %s180, 2
        %s187 = smul.addr %s186, 8
        %s188 = scalar_lea.vmem %s1, %s187
        %s189 = smul.u32 2, %s18
        %s190 = ssub.s32 3, %s189
        %p191 = scmp.lt.s32.totalorder %s190, 2
        %s192 = scalar_select %p191, %s190, 2
        %s193 = smul.u32 128, %s192
        %s194 = smul.u32 2, %s18
        %s195 = ssub.s32 3, %s194
        %p196 = scmp.lt.s32.totalorder %s195, 2
        %s197 = scalar_select %p196, %s195, 2
        %s198 = smul.u32 128, %s197
        %p199 = scmp.lt.s32.totalorder %s194, 2
        %s200 = scalar_select %p199, %s194, 2
        %s201 = smul.addr %s200, 8
        %s202 = scalar_lea.vmem %s2, %s201
        %s203 = smul.u32 2, %s18
        %s204 = ssub.s32 3, %s203
        %p205 = scmp.lt.s32.totalorder %s204, 2
        %s206 = scalar_select %p205, %s204, 2
        %s207 = smul.u32 128, %s206
        %v208 = vld [vmem:[%s188] sm:$0xff]
        %v209 = vld [vmem:[%s188 + $0x8] sm:$0xff]
        %v210 = vld [vmem:[%s202] sm:$0xff]
        %v211 = vld [vmem:[%s202 + $0x8] sm:$0xff]
        %v212 = vsub.s32 %v210, 1
        %v213 = vsub.s32 %v211, 1
        %vm214 = vcmask 261120
        %v215 = vsel %vm214, %v208, -inf
        %216 = vmax.xlane.f32.xlu0 %v215
        %v217 = vpop.xlane.xlu0 %216
        %v218 = vsel %vm214, %v209, -inf
        %219 = vmax.xlane.f32.xlu0 %v218
        %v220 = vpop.xlane.xlu0 %219
        %v221 = vsub.f32 %v208, %v217
        %v222 = vsub.f32 %v209, %v220
        %v223 = vmul.f32 %v221, 1.442695
        %v224 = vpow.pop %v223
        %v225 = vmul.f32 %v222, 1.442695
        %v226 = vpow.pop %v225
        %v227 = vsel %vm214, %v224, 0.0
        %228 = vadd.xlane.f32.xlu0 %v227
        %v229 = vpop.xlane.xlu0 %228
        %v230 = vsel %vm214, %v226, 0.0
        %231 = vadd.xlane.f32.xlu0 %v230
        %v232 = vpop.xlane.xlu0 %231
        %v233 = vlog2.pop %v229
        %v234 = vmul.f32 %v233, 0.6931472
        %v235 = vlog2.pop %v232
        %v236 = vmul.f32 %v235, 0.6931472
        %v237 = vadd.f32 %v217, %v234
        %v238 = vadd.f32 %v220, %v236
        %v239 = vlaneseq
        %v240 = vand.u32 %v239, 127
        %241 = vset.pattern.permute.xlu0 0
        %242 = vperm.xlu0 %241, %v212
        %v243 = vpop.permute.xlu0 %242
        %244 = vset.pattern.permute.xlu0 0
        %245 = vperm.xlu0 %244, %v213
        %v246 = vpop.permute.xlu0 %245
        %vm247 = vcmp.eq.s32.totalorder %v240, %v243
        %vm248 = vcmp.eq.s32.totalorder %v240, %v246
        %v249 = vsel %vm247, %v208, 0.0
        %v250 = vsel %vm248, %v209, 0.0
        %v251 = vsel %vm214, %v249, 0.0
        %252 = vadd.xlane.f32.xlu0 %v251
        %v253 = vpop.xlane.xlu0 %252
        %v254 = vsel %vm214, %v250, 0.0
        %255 = vadd.xlane.f32.xlu0 %v254
        %v256 = vpop.xlane.xlu0 %255
        %v257 = vsub.f32 %v237, %v253
        %v258 = vsub.f32 %v238, %v256
        %s259 = smul.u32 %s18, 16
        %v260 = vlaneseq
        %v261 = vshrl.u32 %v260, 7
        %v262 = vadd.s32 %v261, 8
        %v263 = vstv %s259
        %v264 = vadd.s32 %v263, %v261
        %v265 = vadd.s32 %v263, %v262
        %s266 = sld [smem:[#allocation3]]
        %v267 = vstv %s266
        %vm268 = vcmp.lt.s32.totalorder %v264, %v267
        %vm269 = vcmp.lt.s32.totalorder %v265, %v267
        %v270 = vsel %vm268, %v257, 0.0
        %v271 = vsel %vm269, %v258, 0.0
        %vm272 = vcmask 7168
        %v273 = vsel %vm272, %v270, 0.0
        %v274 = vsel %vm272, %v271, 0.0
        %v275 = vadd.f32 %v273, %v274
        %276 = vadd.xlane.f32.xlu0 %v275
        %v277 = vpop.xlane.xlu0 %276
        %v278 = vrot.slane %v277, 4
        %v279 = vadd.f32 %v277, %v278
        %v280 = vrot.slane %v279, 2
        %v281 = vadd.f32 %v279, %v280
        %v282 = vrot.slane %v281, 1
        %v283 = vadd.f32 %v281, %v282
        %s284 = vtos %v283
        %v285 = vstv %s284
        %286 = vst [vmem:[%s179] sm:$0xff] %v285
        %s287 = sand.u32 %s78, 1
        %s288 = scalar_lea.sflag [#allocation5], %s287
        %s289 = sand.u32 %s78, 1
        %s290 = smul.addr %s289, 8
        %s291 = scalar_lea.vmem [#allocation4], %s290
        // Predicated region
        $region29: #{tpu_custom_call.1} parent=27 // pred_check
          %p292 = pneg %p88
        $region30: #{tpu_custom_call.1} parent=27 // pred_check_branch
          %294 = sbr.rel (%p292) target = $region32
        $region31: #{tpu_custom_call.1} parent=27 // pred_region
          %s296 = ssub.s32 128, 128
          %297 = vsyncadd %s288, %s296
          %s298 = smul.addr %s18, 128
          %s299 = scalar_lea.hbm %s3, %s298
          %s301 = sshll.u32 %s291, 4
          %s302 = int_to_ptr.vmem [resolvable:$true] %s301
          %304 = dma.vmem_to_hbm [thread:$0]  %s302, 128, %s299, %s288
        $region32: #{tpu_custom_call.1} parent=27 // pred_fallthru
          _
      $region28: #{tpu_custom_call.1} parent=5 // pred_fallthru
        _
      %p305 = scmp.le.s32.totalorder 2, %s13
      // Predicated region
      $region33: #{tpu_custom_call.1} parent=5 // pred_check
        %p306 = pneg %p305
      $region34: #{tpu_custom_call.1} parent=5 // pred_check_branch
        %308 = sbr.rel (%p306) target = $region36
      $region35: #{tpu_custom_call.1} parent=5 // pred_region
        %s309 = ssub.s32 %s13, 2
        // Predicated region
        $region37: #{tpu_custom_call.1} parent=35 // pred_check
          %p310 = pneg %p94
        $region38: #{tpu_custom_call.1} parent=35 // pred_check_branch
          %312 = sbr.rel (%p310) target = $region40
        $region39: #{tpu_custom_call.1} parent=35 // pred_region
          %s313 = sand.u32 %s79, 1
          %s314 = scalar_lea.sflag [#allocation5], %s313
          %s315 = sand.u32 %s79, 1
          %s316 = smul.addr %s315, 8
          %s317 = scalar_lea.vmem [#allocation4], %s316
          %318 = dma.done %s314, 128
        $region40: #{tpu_custom_call.1} parent=35 // pred_fallthru
          _
      $region36: #{tpu_custom_call.1} parent=5 // pred_fallthru
        _
    $region6: #{tpu_custom_call.1} parent=1 // loop_footer
      %s17 = sadd.s32 1, %s13
    $region7: #{tpu_custom_call.1} parent=1 // loop_footer_branch
      %12 = sbr.rel target = $region3
    $region8: #{tpu_custom_call.1} parent=1 // loop_exit
      _
    %319 = vsyncpa [#allocation5], 1
    %s320 = scalar_lea.sflag [#allocation5], 1
    %321 = vsyncpa %s320, 1

</llo_original>
